<compile_context>
chip_gen: v5e
topology: v5e:2x2
jax: 0.10.0
libtpu: 0.0.40
codegen_flags: <defaults>
</compile_context>

<pallas_src>
import functools

import jax
import jax.numpy as jnp
from jax.experimental import pallas as pl
from jax.experimental.pallas import tpu as pltpu

LANE = 128  # TPU vreg lane width


def head_kernel(x_ref, wqkv_ref, o_ref, *, batch, seq_len, head_pad, scale):
    T, Hp = seq_len, head_pad
    R = batch * T  # fused row count

    # One fused QKV projection for the whole batch (single MXU push).
    qkv = jnp.dot(x_ref[...], wqkv_ref[...],
                  preferred_element_type=jnp.float32)            # (R, 3*Hp)

    # Lane-aligned static slices (each section padded to 128 lanes).
    q = qkv[:, 0 * Hp:1 * Hp]                                    # (R, Hp)
    k = qkv[:, 1 * Hp:2 * Hp]
    v = qkv[:, 2 * Hp:3 * Hp]

    # Block-diagonal scores: one (R, R) matmul covers every batch.  Contract
    # the head dims directly (no explicit k.T / XLU transpose).  Scale applied
    # on the score tile -- same rounding order as the torch module.
    wei = jax.lax.dot_general(q, k, (((1,), (1,)), ((), ())),
                              preferred_element_type=jnp.float32) * scale

    # Mask = same-batch AND causal, built in-kernel (no (T,T) tril DMA).
    row = jax.lax.broadcasted_iota(jnp.int32, (R, R), 0)
    col = jax.lax.broadcasted_iota(jnp.int32, (R, R), 1)
    if (T & (T - 1)) == 0:                       # power-of-two T -> shift
        shift = T.bit_length() - 1
        same_batch = (row >> shift) == (col >> shift)
    else:
        same_batch = (row // T) == (col // T)
    mask = same_batch & (row >= col)             # diagonal unmasked -> no NaN row
    wei = jnp.where(mask, wei, -jnp.inf)

    # Numerically-stable softmax; cross-batch columns contribute exp(-inf)=0.
    wei = wei - jnp.max(wei, axis=-1, keepdims=True)
    p = jnp.exp(wei)
    denom = jnp.sum(p, axis=-1, keepdims=True)                   # (R, 1)

    # dropout(p) == p in eval mode.  Single output matmul + single lane-dense
    # store.  Exact reciprocal keeps the 1e-4 tolerance; use approx=True (EUP)
    # for intermediate rescales in a flash-style version.
    acc = jnp.dot(p, v, preferred_element_type=jnp.float32)      # (R, Hp)
    o_ref[...] = (acc * pl.reciprocal(denom)).astype(o_ref.dtype)


def pack_qkv_weights(wq, wk, wv):
    """Init-time, one-off packing of Q|K|V into a single (C, 3*Hp) weight.

    Each section is padded up to the 128-lane vreg width so every in-kernel
    slice is lane-aligned and the output store is unmasked.  Do NOT call this
    per forward pass -- cache the result alongside the module weights.
    """
    C, H = wq.shape
    Hp = ((H + LANE - 1) // LANE) * LANE
    pad = lambda w: jnp.pad(w, ((0, 0), (0, Hp - H)))
    return jnp.concatenate([pad(wq), pad(wk), pad(wv)], axis=1)  # (C, 3*Hp)


def head_forward_padded(x, wqkv):
    """Production path: x (B, T, C), pre-packed wqkv (C, 3*Hp) -> (B*T, Hp).

    Output keeps the lane-dense padded layout; the downstream consumer
    (multi-head concat / output projection) should fuse the depad.
    """
    B, T, C = x.shape
    Hp = wqkv.shape[1] // 3
    R = B * T
    # NB: the module really uses C ** (-0.05) (not the usual -0.5); kept as-is.
    scale = float(C) ** (-0.05)

    x2 = x.reshape(R, C)  # contiguous reshape: metadata only

    kernel = functools.partial(head_kernel, batch=B, seq_len=T,
                               head_pad=Hp, scale=scale)

    return pl.pallas_call(
        kernel,
        out_shape=jax.ShapeDtypeStruct((R, Hp), x.dtype),
        grid_spec=pltpu.PrefetchScalarGridSpec(
            num_scalar_prefetch=0,
            grid=(1,),               # whole problem fits one step at these sizes
            in_specs=[
                pl.BlockSpec((R, C), lambda i: (0, 0)),        # flattened x
                pl.BlockSpec((C, 3 * Hp), lambda i: (0, 0)),   # fused W_qkv
            ],
            out_specs=pl.BlockSpec((R, Hp), lambda i: (0, 0)),
        ),
        compiler_params=pltpu.CompilerParams(
            dimension_semantics=("arbitrary",),
        ),
    )(x2, wqkv)


def head_forward(x, wq, wk, wv):
    """Drop-in parity with the torch module: packs + depads (test/compat path)."""
    B, T, _ = x.shape
    H = wq.shape[1]
    wqkv = pack_qkv_weights(wq, wk, wv)
    out = head_forward_padded(x, wqkv)
    return out[:, :H].reshape(B, T, H)


def reference_forward(x, wq, wk, wv, context):
    B, T, C = x.shape
    q = x @ wq
    k = x @ wk
    v = x @ wv
    wei = jnp.einsum("btd,bsd->bts", q, k) * (float(C) ** (-0.05))
    tril = jnp.tril(jnp.ones((context, context), dtype=jnp.float32))
    wei = jnp.where(tril[:T, :T] == 0.0, -jnp.inf, wei)
    wei = jax.nn.softmax(wei, axis=-1)
    return wei @ v


if __name__ == "__main__":
    # Small shapes consistent with the module: batch=2, seq(T)=8, emb=32, head=16.
    B, T, C, H = 2, 8, 32, 16
    context = 8

    key = jax.random.PRNGKey(0)
    kx, kq, kk, kv = jax.random.split(key, 4)

    x = jax.random.normal(kx, (B, T, C), dtype=jnp.float32)
    # Deterministic Linear weights (torch Linear stores (H, C); we use (C, H) = W.T).
    bound = 1.0 / (C ** 0.5)
    wq = jax.random.uniform(kq, (C, H), jnp.float32, -bound, bound)
    wk = jax.random.uniform(kk, (C, H), jnp.float32, -bound, bound)
    wv = jax.random.uniform(kv, (C, H), jnp.float32, -bound, bound)

    # Init-time packing (done once, cached alongside the weights).
    wqkv = pack_qkv_weights(wq, wk, wv)

    # Production path: lane-dense padded output.
    out_padded = head_forward_padded(x, wqkv)
    jax.block_until_ready(out_padded)

    # Depad only in the test harness for comparison against the reference.
    out = out_padded[:, :H].reshape(B, T, H)
    ref = reference_forward(x, wq, wk, wv, context)
    assert out.shape == (B, T, H)
    assert jnp.allclose(out, ref, atol=1e-4, rtol=1e-4), (
        float(jnp.max(jnp.abs(out - ref))))

    # Compatibility wrapper path should match too.
    out2 = head_forward(x, wq, wk, wv)
    jax.block_until_ready(out2)
    assert jnp.allclose(out2, ref, atol=1e-4, rtol=1e-4)

    print("KERNEL_OK")
</pallas_src>

<mosaic_0001>
module attributes {stable_mosaic.version = 11 : i64} {
  func.func @head_kernel(%arg0: i32, %arg1: memref<16x32xf32, #tpu.memory_space<vmem>>, %arg2: memref<32x384xf32, #tpu.memory_space<vmem>>, %arg3: memref<16x128xf32, #tpu.memory_space<vmem>>) attributes {dimension_semantics = [#tpu.dimension_semantics<arbitrary>], iteration_bounds = array<i64: 1>, scalar_prefetch = 0 : i64, scratch_operands = 0 : i64, tpu.core_type = #tpu.core_type<tc>, window_params = [{pipeline_mode = #tpu.pipeline_mode<synchronous>, transform_indices = @transform_0, window_bounds = array<i64: 16, 32>}, {pipeline_mode = #tpu.pipeline_mode<synchronous>, transform_indices = @transform_1, window_bounds = array<i64: 32, 384>}, {pipeline_mode = #tpu.pipeline_mode<synchronous>, transform_indices = @transform_2, window_bounds = array<i64: 16, 128>}]} {
    %c0 = arith.constant 0 : index
    %c0_0 = arith.constant 0 : index
    %0 = vector.load %arg1[%c0, %c0_0] : memref<16x32xf32, #tpu.memory_space<vmem>>, vector<16x32xf32>
    %c0_1 = arith.constant 0 : index
    %c0_2 = arith.constant 0 : index
    %1 = vector.load %arg2[%c0_1, %c0_2] : memref<32x384xf32, #tpu.memory_space<vmem>>, vector<32x384xf32>
    %cst = arith.constant dense<0.000000e+00> : vector<16x384xf32>
    %2 = tpu.matmul %0, %1, %cst {dimension_numbers = #tpu.dot_dimension_numbers<[1], [0], [0], [1], [0, 0, 1, 1], [], []>} : vector<16x32xf32>, vector<32x384xf32>, vector<16x384xf32> -> vector<16x384xf32>
    %3 = vector.extract_strided_slice %2 {offsets = [0, 0], sizes = [16, 128], strides = [1, 1]} : vector<16x384xf32> to vector<16x128xf32>
    %4 = vector.extract_strided_slice %2 {offsets = [0, 128], sizes = [16, 128], strides = [1, 1]} : vector<16x384xf32> to vector<16x128xf32>
    %5 = vector.extract_strided_slice %2 {offsets = [0, 256], sizes = [16, 128], strides = [1, 1]} : vector<16x384xf32> to vector<16x128xf32>
    %cst_3 = arith.constant dense<0.000000e+00> : vector<16x16xf32>
    %6 = tpu.matmul %3, %4, %cst_3 {dimension_numbers = #tpu.dot_dimension_numbers<[1], [1], [0], [0], [0, 0, 1, 0], [], []>} : vector<16x128xf32>, vector<16x128xf32>, vector<16x16xf32> -> vector<16x16xf32>
    %cst_4 = arith.constant 0.840896427 : f32
    %7 = vector.broadcast %cst_4 : f32 to vector<16x16xf32>
    %8 = arith.mulf %6, %7 : vector<16x16xf32>
    %9 = tpu.iota {dimensions = array<i32: 0>} : vector<16x16xi32>
    %10 = tpu.iota {dimensions = array<i32: 1>} : vector<16x16xi32>
    %c3_i32 = arith.constant 3 : i32
    %11 = vector.broadcast %c3_i32 : i32 to vector<16x16xi32>
    %12 = arith.shrsi %9, %11 : vector<16x16xi32>
    %c3_i32_5 = arith.constant 3 : i32
    %13 = vector.broadcast %c3_i32_5 : i32 to vector<16x16xi32>
    %14 = arith.shrsi %10, %13 : vector<16x16xi32>
    %15 = arith.cmpi eq, %12, %14 : vector<16x16xi32>
    %16 = arith.cmpi sge, %9, %10 : vector<16x16xi32>
    %17 = arith.andi %15, %16 : vector<16x16xi1>
    %cst_6 = arith.constant 0xFF800000 : f32
    %18 = vector.broadcast %cst_6 : f32 to vector<16x16xf32>
    %19 = arith.select %17, %8, %18 : vector<16x16xi1>, vector<16x16xf32>
    %cst_7 = arith.constant dense<0xFF800000> : vector<16xf32>
    %20 = vector.multi_reduction <maximumf>, %19, %cst_7 [1] : vector<16x16xf32> to vector<16xf32>
    %21 = vector.shape_cast %20 : vector<16xf32> to vector<16x1xf32>
    %22 = vector.broadcast %21 : vector<16x1xf32> to vector<16x16xf32>
    %23 = arith.subf %19, %22 : vector<16x16xf32>
    %24 = math.exp %23 : vector<16x16xf32>
    %cst_8 = arith.constant dense<0.000000e+00> : vector<16xf32>
    %25 = vector.multi_reduction <add>, %24, %cst_8 [1] : vector<16x16xf32> to vector<16xf32>
    %26 = vector.shape_cast %25 : vector<16xf32> to vector<16x1xf32>
    %cst_9 = arith.constant dense<0.000000e+00> : vector<16x128xf32>
    %27 = tpu.matmul %24, %5, %cst_9 {dimension_numbers = #tpu.dot_dimension_numbers<[1], [0], [0], [1], [0, 0, 1, 1], [], []>} : vector<16x16xf32>, vector<16x128xf32>, vector<16x128xf32> -> vector<16x128xf32>
    %28 = tpu.reciprocal %26 : vector<16x1xf32> -> vector<16x1xf32>
    %29 = vector.broadcast %28 : vector<16x1xf32> to vector<16x128xf32>
    %30 = arith.mulf %27, %29 : vector<16x128xf32>
    %c0_10 = arith.constant 0 : index
    %c0_11 = arith.constant 0 : index
    %31 = vector.load %arg3[%c0_10, %c0_11] : memref<16x128xf32, #tpu.memory_space<vmem>>, vector<16x128xf32>
    tpu.vector_store %arg3[%c0_10, %c0_11], %30 {strides = array<i32>} : memref<16x128xf32, #tpu.memory_space<vmem>>, vector<16x128xf32>,
    return
  }
  func.func @transform_0(%arg0: i32) -> (i32, i32) {
    %c0_i32 = arith.constant 0 : i32
    %c0_i32_0 = arith.constant 0 : i32
    %c0_i32_1 = arith.constant 0 : i32
    return %c0_i32, %c0_i32_0 : i32, i32
  }
  func.func @transform_1(%arg0: i32) -> (i32, i32) {
    %c0_i32 = arith.constant 0 : i32
    %c0_i32_0 = arith.constant 0 : i32
    %c0_i32_1 = arith.constant 0 : i32
    return %c0_i32, %c0_i32_0 : i32, i32
  }
  func.func @transform_2(%arg0: i32) -> (i32, i32) {
    %c0_i32 = arith.constant 0 : i32
    %c0_i32_0 = arith.constant 0 : i32
    %c0_i32_1 = arith.constant 0 : i32
    return %c0_i32, %c0_i32_0 : i32, i32
  }
}

</mosaic_0001>

<llo_original>
// kernel: tpu_custom_call.1
$region0: #{tpu_custom_call.1}
  #allocation0 [shape = 'u32[]', space=smem, size = 0x4, offset = 0x4, fixed_abs, tag = 'smem constant byte address 0x4 - core index']
  #allocation1 [shape = 'u32[72,128]{1,0:T(1,128)}', space=vmem, size = 0x9000, scoped, tag = 'internal scratch']
  %s0 = inlined_call_operand.hbm [shape: f32[16,32], index: 0, kind: input, shape index: {}]
  %s1 = inlined_call_operand.hbm [shape: f32[32,384], index: 1, kind: input, shape index: {}]
  %s2 = inlined_call_operand.hbm [shape: f32[16,128], index: 2, kind: output, shape index: {}]
  %s3 = sld [smem:[#allocation0]]
  $region26: #{tpu_custom_call.1} parent=0
    _
  %s5 = ssub.s32 1, %s3
  %s6 = scalar_select 0, %s5, %s3
  $region1: #{tpu_custom_call.1} parent=0
    #allocation2 [shape = 'u8[8192]{0}', space=vmem, size = 0x2000, scoped, tag = 'input window, operand 0, single buffered']
    #allocation3 [shape = 's32[1]{0}', space=sflag, size = 0x4, scoped, tag = 'scoped memory for tpu_custom_call.1']
    #allocation4 [shape = 's32[1]{0}', space=sflag, size = 0x4, scoped, tag = 'scoped memory for tpu_custom_call.1']
    #allocation5 [shape = 'u8[49152]{0}', space=vmem, size = 0xc000, scoped, tag = 'input window, operand 1, single buffered']
    #allocation6 [shape = 's32[1]{0}', space=sflag, size = 0x4, scoped, tag = 'scoped memory for tpu_custom_call.1']
    #allocation7 [shape = 'u8[8192]{0}', space=vmem, size = 0x2000, scoped, tag = 'output window, operand 0, single buffered']
    %7 = vsyncpa [#allocation3], 0
    %8 = vsyncpa [#allocation6], 0
    %9 = vsyncpa [#allocation4], 0
    // Predicated region
    $region2: #{tpu_custom_call.1} parent=1 // pred_check
      _
    $region3: #{tpu_custom_call.1} parent=1 // pred_check_branch
      %11 = sbr.rel (0) target = $region5
    $region4: #{tpu_custom_call.1} parent=1 // pred_region
      %13 = vsyncadd [#allocation3], 0
      %s14 = sshll.u32 %s0, 4
      %s15 = int_to_ptr.hbm [resolvable:$true] %s14
      %s16 = sshll.u32 [#allocation2], 4
      %s17 = int_to_ptr.vmem [resolvable:$true] %s16
      %22 = dma.hbm_to_vmem [thread:$0]  %s15, 256, %s17, [#allocation3], 128, 128, 8
    $region5: #{tpu_custom_call.1} parent=1 // pred_fallthru
      _
    // Predicated region
    $region6: #{tpu_custom_call.1} parent=1 // pred_check
      _
    $region7: #{tpu_custom_call.1} parent=1 // pred_check_branch
      %24 = sbr.rel (0) target = $region9
    $region8: #{tpu_custom_call.1} parent=1 // pred_region
      %26 = vsyncadd [#allocation6], 0
      %s27 = sshll.u32 %s1, 4
      %s28 = int_to_ptr.hbm [resolvable:$true] %s27
      %s29 = sshll.u32 [#allocation5], 4
      %s30 = int_to_ptr.vmem [resolvable:$true] %s29
      %35 = dma.hbm_to_vmem [thread:$0]  %s28, 1536, %s30, [#allocation6], 384, 384, 24
    $region9: #{tpu_custom_call.1} parent=1 // pred_fallthru
      _
    // Predicated region
    $region10: #{tpu_custom_call.1} parent=1 // pred_check
      _
    $region11: #{tpu_custom_call.1} parent=1 // pred_check_branch
      %37 = sbr.rel (0) target = $region13
    $region12: #{tpu_custom_call.1} parent=1 // pred_region
      %39 = dma.done [#allocation3], 256
    $region13: #{tpu_custom_call.1} parent=1 // pred_fallthru
      _
    // Predicated region
    $region14: #{tpu_custom_call.1} parent=1 // pred_check
      _
    $region15: #{tpu_custom_call.1} parent=1 // pred_check_branch
      %41 = sbr.rel (0) target = $region17
    $region16: #{tpu_custom_call.1} parent=1 // pred_region
      %43 = dma.done [#allocation6], 1536
    $region17: #{tpu_custom_call.1} parent=1 // pred_fallthru
      _
    %v44 = vld [vmem:[#allocation2] sm:$0xff]
    %v45 = vld [vmem:[#allocation2 + $0x8] sm:$0xff]
    %v46 = vld [vmem:[#allocation5] sm:$0xff]
    %v47 = vld [vmem:[#allocation5 + $0x8] sm:$0xff]
    %v48 = vld [vmem:[#allocation5 + $0x10] sm:$0xff]
    %v49 = vld [vmem:[#allocation5 + $0x18] sm:$0xff]
    %v50 = vld [vmem:[#allocation5 + $0x20] sm:$0xff]
    %v51 = vld [vmem:[#allocation5 + $0x28] sm:$0xff]
    %v52 = vld [vmem:[#allocation5 + $0x30] sm:$0xff]
    %v53 = vld [vmem:[#allocation5 + $0x38] sm:$0xff]
    %v54 = vld [vmem:[#allocation5 + $0x40] sm:$0xff]
    %v55 = vld [vmem:[#allocation5 + $0x48] sm:$0xff]
    %v56 = vld [vmem:[#allocation5 + $0x50] sm:$0xff]
    %v57 = vld [vmem:[#allocation5 + $0x58] sm:$0xff]
    %vm58 = vcmask 261120
    %v60 = vsel %vm58, %v44, 0
    %v63 = vsel %vm58, %v45, 0
    %65 = vmatpush.msra.mxu0 0.0
    %66 = vmatpush.msra.mxu0 0.0
    %67 = vmatpush.msra.mxu0 0.0
    %68 = vmatpush.msra.mxu0 0.0
    %69 = vmatpush.msra.mxu0 0.0
    %70 = vmatpush.msra.mxu0 0.0
    %71 = vmatpush.msra.mxu0 0.0
    %72 = vmatpush.msra.mxu0 0.0
    %73 = vmatpush.msra.mxu0 0.0
    %74 = vmatpush.msra.mxu0 0.0
    %75 = vmatpush.msra.mxu0 0.0
    %76 = vmatpush.msra.mxu0 0.0
    %77 = vmatpush.msra.mxu0 %v55
    %78 = vmatpush.msra.mxu0 %v52
    %79 = vmatpush.msra.mxu0 %v49
    %80 = vmatpush.msra.mxu0 %v46
    %81 = vmatmul.f32.gmra.mxu0 %v60
    %v82 = vpop.f32.mrf.mxu0
    %v83 = vadd.f32 0.0, %v82
    %84 = vmatmul.f32.gmra.mxu0 %v63
    %v85 = vpop.f32.mrf.mxu0
    %v86 = vadd.f32 0.0, %v85
    %87 = vdwg.mxu0
    %88 = vmatpush.msra.mxu0 0.0
    %89 = vmatpush.msra.mxu0 0.0
    %90 = vmatpush.msra.mxu0 0.0
    %91 = vmatpush.msra.mxu0 0.0
    %92 = vmatpush.msra.mxu0 0.0
    %93 = vmatpush.msra.mxu0 0.0
    %94 = vmatpush.msra.mxu0 0.0
    %95 = vmatpush.msra.mxu0 0.0
    %96 = vmatpush.msra.mxu0 0.0
    %97 = vmatpush.msra.mxu0 0.0
    %98 = vmatpush.msra.mxu0 0.0
    %99 = vmatpush.msra.mxu0 0.0
    %100 = vmatpush.msra.mxu0 %v56
    %101 = vmatpush.msra.mxu0 %v53
    %102 = vmatpush.msra.mxu0 %v50
    %103 = vmatpush.msra.mxu0 %v47
    %104 = vmatmul.f32.gmra.mxu0 %v60
    %v105 = vpop.f32.mrf.mxu0
    %v106 = vadd.f32 0.0, %v105
    %107 = vmatmul.f32.gmra.mxu0 %v63
    %v108 = vpop.f32.mrf.mxu0
    %v109 = vadd.f32 0.0, %v108
    %110 = vdwg.mxu0
    %111 = vmatpush.msra.mxu0 0.0
    %112 = vmatpush.msra.mxu0 0.0
    %113 = vmatpush.msra.mxu0 0.0
    %114 = vmatpush.msra.mxu0 0.0
    %115 = vmatpush.msra.mxu0 0.0
    %116 = vmatpush.msra.mxu0 0.0
    %117 = vmatpush.msra.mxu0 0.0
    %118 = vmatpush.msra.mxu0 0.0
    %119 = vmatpush.msra.mxu0 0.0
    %120 = vmatpush.msra.mxu0 0.0
    %121 = vmatpush.msra.mxu0 0.0
    %122 = vmatpush.msra.mxu0 0.0
    %123 = vmatpush.msra.mxu0 %v57
    %124 = vmatpush.msra.mxu0 %v54
    %125 = vmatpush.msra.mxu0 %v51
    %126 = vmatpush.msra.mxu0 %v48
    %127 = vmatmul.f32.gmra.mxu0 %v60
    %v128 = vpop.f32.mrf.mxu0
    %v129 = vadd.f32 0.0, %v128
    %130 = vmatmul.f32.gmra.mxu0 %v63
    %v131 = vpop.f32.mrf.mxu0
    %v132 = vadd.f32 0.0, %v131
    %133 = vdwg.mxu0
    %134 = vmatpush.xpose.msra.mxu0 0.0
    %135 = vmatpush.xpose.msra.mxu0 0.0
    %136 = vmatpush.xpose.msra.mxu0 0.0
    %137 = vmatpush.xpose.msra.mxu0 0.0
    %138 = vmatpush.xpose.msra.mxu0 0.0
    %139 = vmatpush.xpose.msra.mxu0 0.0
    %140 = vmatpush.xpose.msra.mxu0 0.0
    %141 = vmatpush.xpose.msra.mxu0 0.0
    %142 = vmatpush.xpose.msra.mxu0 0.0
    %143 = vmatpush.xpose.msra.mxu0 0.0
    %144 = vmatpush.xpose.msra.mxu0 0.0
    %145 = vmatpush.xpose.msra.mxu0 0.0
    %146 = vmatpush.xpose.msra.mxu0 0.0
    %147 = vmatpush.xpose.msra.mxu0 0.0
    %148 = vmatpush.xpose.msra.mxu0 %v109
    %149 = vmatpush.xpose.msra.mxu0 %v106
    %150 = vmatmul.f32.gmra.mxu0 %v83
    %v151 = vpop.f32.mrf.mxu0
    %v152 = vadd.f32 0.0, %v151
    %153 = vmatmul.f32.gmra.mxu0 %v86
    %v154 = vpop.f32.mrf.mxu0
    %v155 = vadd.f32 0.0, %v154
    %156 = vdwg.mxu0
    %v157 = vmul.f32 %v152, 0.8408964
    %v158 = vmul.f32 %v155, 0.8408964
    %v159 = vlaneseq
    %v160 = vshrl.u32 %v159, 7
    %v161 = vadd.s32 %v160, 8
    %v162 = vlaneseq
    %v163 = vand.u32 %v162, 127
    %v164 = vshra.s32 %v160, 3
    %v165 = vshra.s32 %v161, 3
    %v166 = vshra.s32 %v163, 3
    %vm167 = vcmp.eq.s32.totalorder %v164, %v166
    %vm168 = vcmp.eq.s32.totalorder %v165, %v166
    %vm169 = vcmp.ge.s32.totalorder %v160, %v163
    %vm170 = vcmp.ge.s32.totalorder %v161, %v163
    %vm171 = vmand %vm167, %vm169
    %vm172 = vmand %vm168, %vm170
    %v173 = vsel %vm171, %v157, -inf
    %v174 = vsel %vm172, %v158, -inf
    %vm175 = vcmask 130048
    %v176 = vsel %vm175, %v173, -inf
    %177 = vmax.xlane.f32.xlu0 %v176
    %v178 = vpop.xlane.xlu0 %177
    %v179 = vsel %vm175, %v174, -inf
    %180 = vmax.xlane.f32.xlu0 %v179
    %v181 = vpop.xlane.xlu0 %180
    %v182 = vsub.f32 %v173, %v178
    %v183 = vsub.f32 %v174, %v181
    %v184 = vmul.f32 %v182, 1.442695
    %v185 = vpow.pop %v184
    %v186 = vmul.f32 %v183, 1.442695
    %v187 = vpow.pop %v186
    %v188 = vsel %vm175, %v185, 0.0
    %189 = vadd.xlane.f32.xlu0 %v188
    %v190 = vpop.xlane.xlu0 %189
    %v191 = vsel %vm175, %v187, 0.0
    %192 = vadd.xlane.f32.xlu0 %v191
    %v193 = vpop.xlane.xlu0 %192
    %v195 = vsel %vm175, %v185, 0
    %v198 = vsel %vm175, %v187, 0
    %200 = vmatpush.msra.mxu0 0.0
    %201 = vmatpush.msra.mxu0 0.0
    %202 = vmatpush.msra.mxu0 0.0
    %203 = vmatpush.msra.mxu0 0.0
    %204 = vmatpush.msra.mxu0 0.0
    %205 = vmatpush.msra.mxu0 0.0
    %206 = vmatpush.msra.mxu0 0.0
    %207 = vmatpush.msra.mxu0 0.0
    %208 = vmatpush.msra.mxu0 0.0
    %209 = vmatpush.msra.mxu0 0.0
    %210 = vmatpush.msra.mxu0 0.0
    %211 = vmatpush.msra.mxu0 0.0
    %212 = vmatpush.msra.mxu0 0.0
    %213 = vmatpush.msra.mxu0 0.0
    %214 = vmatpush.msra.mxu0 %v132
    %215 = vmatpush.msra.mxu0 %v129
    %216 = vmatmul.f32.gmra.mxu0 %v195
    %v217 = vpop.f32.mrf.mxu0
    %v218 = vadd.f32 0.0, %v217
    %219 = vmatmul.f32.gmra.mxu0 %v198
    %v220 = vpop.f32.mrf.mxu0
    %v221 = vadd.f32 0.0, %v220
    %222 = vdwg.mxu0
    %v223 = vrcp.pop %v190
    %v224 = vmul.f32 %v190, %v223
    %v225 = vsub.f32 1.0, %v224
    %v226 = vmul.f32 %v223, %v225
    %v227 = vadd.f32 %v223, %v226
    %vm228 = vweird.f32 %v190
    %vm229 = vweird.f32 %v223
    %vm230 = vmor %vm228, %vm229
    %v231 = vsel %vm230, %v223, %v227
    %v232 = vand.u32 2147483647, %v190
    %vm233 = vcmp.eq.f32.partialorder %v232, 8.507059e+37
    %v234 = vand.u32 %v190, 2147483648
    %v235 = vor.u32 1.1754944e-38, %v234
    %v236 = vsel %vm233, %v235, %v231
    %v237 = vrcp.pop %v193
    %v238 = vmul.f32 %v193, %v237
    %v239 = vsub.f32 1.0, %v238
    %v240 = vmul.f32 %v237, %v239
    %v241 = vadd.f32 %v237, %v240
    %vm242 = vweird.f32 %v193
    %vm243 = vweird.f32 %v237
    %vm244 = vmor %vm242, %vm243
    %v245 = vsel %vm244, %v237, %v241
    %v246 = vand.u32 2147483647, %v193
    %vm247 = vcmp.eq.f32.partialorder %v246, 8.507059e+37
    %v248 = vand.u32 %v193, 2147483648
    %v249 = vor.u32 1.1754944e-38, %v248
    %v250 = vsel %vm247, %v249, %v245
    %v251 = vmul.f32 %v218, %v236
    %v252 = vmul.f32 %v221, %v250
    %253 = vst [vmem:[#allocation7] sm:$0xff] %v251
    %254 = vst [vmem:[#allocation7 + $0x8] sm:$0xff] %v252
    // Predicated region
    $region18: #{tpu_custom_call.1} parent=1 // pred_check
      _
    $region19: #{tpu_custom_call.1} parent=1 // pred_check_branch
      %256 = sbr.rel (0) target = $region21
    $region20: #{tpu_custom_call.1} parent=1 // pred_region
      %258 = vsyncadd [#allocation4], 0
      %s259 = sshll.u32 [#allocation7], 4
      %s260 = int_to_ptr.vmem [resolvable:$true] %s259
      %s261 = sshll.u32 %s2, 4
      %s262 = int_to_ptr.hbm [resolvable:$true] %s261
      %267 = dma.vmem_to_hbm [thread:$0]  %s260, 256, %s262, [#allocation4], 128, 128, 8
    $region21: #{tpu_custom_call.1} parent=1 // pred_fallthru
      _
    // Predicated region
    $region22: #{tpu_custom_call.1} parent=1 // pred_check
      _
    $region23: #{tpu_custom_call.1} parent=1 // pred_check_branch
      %269 = sbr.rel (0) target = $region25
    $region24: #{tpu_custom_call.1} parent=1 // pred_region
      %271 = dma.done [#allocation4], 256
    $region25: #{tpu_custom_call.1} parent=1 // pred_fallthru
      _
    %272 = vsyncpa [#allocation3], 1
    %273 = vsyncpa [#allocation6], 1
    %274 = vsyncpa [#allocation4], 1

</llo_original>
